<compile_context>
chip_gen: v6e
topology: v6e:2x2x1
jax: 0.10.0
libtpu: 0.0.40
codegen_flags: <defaults>
</compile_context>

<pallas_src>
import functools

import jax
import jax.numpy as jnp
from jax.experimental import pallas as pl
from jax.experimental.pallas import tpu as pltpu


def _round_up(x, m):
    return (x + m - 1) // m * m


def _geglu_kernel(x_ref, w_ref, b_ref, o_ref, *, tn):
    # x_ref: (tm, dim_in)   w_ref: (dim_in, 2*tn)   b_ref: (1, 2*tn)   o_ref: (tm, tn)
    # Single fused MXU pass producing both the value half and the gate half for
    # this output tile (weight columns were tile-interleaved in the wrapper).
    y = jnp.dot(x_ref[...], w_ref[...], preferred_element_type=jnp.float32)
    y = y + b_ref[...].astype(jnp.float32)

    h = y[:, :tn]     # value half (lane-aligned split: tn % 128 == 0)
    g = y[:, tn:]     # gate half

    # Exact (erf-based) GELU, matching torch.nn.functional.gelu default; f32 epilogue.
    inv_sqrt2 = jnp.float32(0.7071067811865476)
    gelu_g = 0.5 * g * (1.0 + jax.lax.erf(g * inv_sqrt2))

    o_ref[...] = (h * gelu_g).astype(o_ref.dtype)


@functools.partial(jax.jit, static_argnames=("tm", "tn"))
def geglu_pallas(x, w, b, *, tm=256, tn=512):
    """x: (..., dim_in); w: (dim_in, 2*dim_out); b: (2*dim_out,)."""
    *lead, dim_in = x.shape
    dim_out = w.shape[1] // 2

    x2d = x.reshape(-1, dim_in)
    m = x2d.shape[0]

    # Clamp tile sizes to the (padded) problem size; keep sublane/lane alignment.
    tm = min(tm, _round_up(m, 8))          # multiple of 8 (f32 sublane tiling)
    tn = min(tn, _round_up(dim_out, 128))  # multiple of 128 (lane-dense stores)
    mp = _round_up(m, tm)
    dp = _round_up(dim_out, tn)
    n_m = mp // tm
    n_n = dp // tn

    # Zero-pad ragged M and non-128-multiple dim_out; padded regions are sliced off.
    xp = jnp.pad(x2d, ((0, mp - m), (0, 0)))
    wx = jnp.pad(w[:, :dim_out], ((0, 0), (0, dp - dim_out)))
    wg = jnp.pad(w[:, dim_out:], ((0, 0), (0, dp - dim_out)))
    bx = jnp.pad(b[:dim_out], (0, dp - dim_out))
    bg = jnp.pad(b[dim_out:], (0, dp - dim_out))

    # Interleave value/gate weight columns per output tile so one contiguous
    # (dim_in, 2*tn) block covers both halves needed by output tile j.
    wf = jnp.concatenate(
        [wx.reshape(dim_in, n_n, tn), wg.reshape(dim_in, n_n, tn)], axis=-1
    ).reshape(dim_in, 2 * dp)
    bf = jnp.concatenate(
        [bx.reshape(n_n, tn), bg.reshape(n_n, tn)], axis=-1
    ).reshape(1, 2 * dp)

    # TODO(synk): for very large dim_in, add a K grid axis ("arbitrary") with an
    # f32 accumulator scratch so the per-step weight block stays within v7x's
    # 64 MiB VMEM; full-K blocks are fine for typical GEGLU widths.

    out_itemsize = jnp.dtype(x.dtype).itemsize
    cost = pl.CostEstimate(
        flops=2 * mp * dim_in * 2 * dp,
        transcendentals=mp * dp,
        bytes_accessed=(xp.size * jnp.dtype(xp.dtype).itemsize
                        + wf.size * jnp.dtype(wf.dtype).itemsize
                        + bf.size * jnp.dtype(bf.dtype).itemsize
                        + mp * dp * out_itemsize),
    )

    out2d = pl.pallas_call(
        functools.partial(_geglu_kernel, tn=tn),
        out_shape=jax.ShapeDtypeStruct((mp, dp), x.dtype),
        grid_spec=pltpu.PrefetchScalarGridSpec(
            num_scalar_prefetch=0,
            grid=(n_m, n_n),
            in_specs=[
                pl.BlockSpec((tm, dim_in), lambda i, j: (i, 0)),      # x tile
                pl.BlockSpec((dim_in, 2 * tn), lambda i, j: (0, j)),  # fused W tile
                pl.BlockSpec((1, 2 * tn), lambda i, j: (0, j)),       # fused bias tile
            ],
            out_specs=pl.BlockSpec((tm, tn), lambda i, j: (i, j)),
        ),
        compiler_params=pltpu.CompilerParams(
            dimension_semantics=("parallel", "parallel"),
            vmem_limit_bytes=48 * 1024 * 1024,
        ),
        cost_estimate=cost,
    )(xp, wf, bf)

    return out2d[:m, :dim_out].reshape(*lead, dim_out)


def geglu_reference(x, w, b):
    dim_out = w.shape[1] // 2
    y = jnp.einsum("...i,ij->...j", x, w) + b
    h, g = y[..., :dim_out], y[..., dim_out:]
    return h * jax.nn.gelu(g, approximate=False)


if __name__ == "__main__":
    key = jax.random.PRNGKey(0)
    batch, seq, dim_in, dim_out = 2, 8, 32, 32

    kx, kw, kb = jax.random.split(key, 3)
    x = jax.random.normal(kx, (batch, seq, dim_in), dtype=jnp.float32)
    # Deterministic "Linear(dim_in, 2*dim_out)" params (PyTorch stores [out, in];
    # here we build the already-transposed [in, out] matrix).
    w = jax.random.normal(kw, (dim_in, 2 * dim_out), dtype=jnp.float32) * 0.05
    b = jax.random.normal(kb, (2 * dim_out,), dtype=jnp.float32) * 0.05

    out = geglu_pallas(x, w, b)
    jax.block_until_ready(out)

    ref = geglu_reference(x, w, b)
    assert out.shape == (batch, seq, dim_out)
    assert jnp.allclose(out, ref, atol=1e-5, rtol=1e-5), "mismatch vs reference"

    print("KERNEL_OK")
</pallas_src>

<mosaic_0001>
module attributes {stable_mosaic.version = 11 : i64} {
  func.func @_geglu_kernel(%arg0: i32, %arg1: i32, %arg2: memref<16x32xf32, #tpu.memory_space<vmem>>, %arg3: memref<32x256xf32, #tpu.memory_space<vmem>>, %arg4: memref<1x256xf32, #tpu.memory_space<vmem>>, %arg5: memref<16x128xf32, #tpu.memory_space<vmem>>) attributes {dimension_semantics = [#tpu.dimension_semantics<parallel>, #tpu.dimension_semantics<parallel>], iteration_bounds = array<i64: 1, 1>, scalar_prefetch = 0 : i64, scratch_operands = 0 : i64, tpu.core_type = #tpu.core_type<tc>, window_params = [{transform_indices = @transform_0, window_bounds = array<i64: 16, 32>}, {transform_indices = @transform_1, window_bounds = array<i64: 32, 256>}, {transform_indices = @transform_2, window_bounds = array<i64: 1, 256>}, {transform_indices = @transform_3, window_bounds = array<i64: 16, 128>}]} {
    %c0 = arith.constant 0 : index
    %c0_0 = arith.constant 0 : index
    %0 = vector.load %arg2[%c0, %c0_0] : memref<16x32xf32, #tpu.memory_space<vmem>>, vector<16x32xf32>
    %c0_1 = arith.constant 0 : index
    %c0_2 = arith.constant 0 : index
    %1 = vector.load %arg3[%c0_1, %c0_2] : memref<32x256xf32, #tpu.memory_space<vmem>>, vector<32x256xf32>
    %cst = arith.constant dense<0.000000e+00> : vector<16x256xf32>
    %2 = tpu.matmul %0, %1, %cst {dimension_numbers = #tpu.dot_dimension_numbers<[1], [0], [0], [1], [0, 0, 1, 1], [], []>} : vector<16x32xf32>, vector<32x256xf32>, vector<16x256xf32> -> vector<16x256xf32>
    %c0_3 = arith.constant 0 : index
    %c0_4 = arith.constant 0 : index
    %3 = vector.load %arg4[%c0_3, %c0_4] : memref<1x256xf32, #tpu.memory_space<vmem>>, vector<1x256xf32>
    %4 = vector.broadcast %3 : vector<1x256xf32> to vector<16x256xf32>
    %5 = arith.addf %2, %4 : vector<16x256xf32>
    %6 = vector.extract_strided_slice %5 {offsets = [0, 0], sizes = [16, 128], strides = [1, 1]} : vector<16x256xf32> to vector<16x128xf32>
    %7 = vector.extract_strided_slice %5 {offsets = [0, 128], sizes = [16, 128], strides = [1, 1]} : vector<16x256xf32> to vector<16x128xf32>
    %cst_5 = arith.constant 5.000000e-01 : f32
    %8 = vector.broadcast %cst_5 : f32 to vector<16x128xf32>
    %9 = arith.mulf %8, %7 : vector<16x128xf32>
    %cst_6 = arith.constant 0.707106769 : f32
    %10 = vector.broadcast %cst_6 : f32 to vector<16x128xf32>
    %11 = arith.mulf %7, %10 : vector<16x128xf32>
    %12 = math.erf %11 : vector<16x128xf32>
    %cst_7 = arith.constant 1.000000e+00 : f32
    %13 = vector.broadcast %cst_7 : f32 to vector<16x128xf32>
    %14 = arith.addf %13, %12 : vector<16x128xf32>
    %15 = arith.mulf %9, %14 : vector<16x128xf32>
    %16 = arith.mulf %6, %15 : vector<16x128xf32>
    %c0_8 = arith.constant 0 : index
    %c0_9 = arith.constant 0 : index
    %17 = vector.load %arg5[%c0_8, %c0_9] : memref<16x128xf32, #tpu.memory_space<vmem>>, vector<16x128xf32>
    tpu.vector_store %arg5[%c0_8, %c0_9], %16 {strides = array<i32>} : memref<16x128xf32, #tpu.memory_space<vmem>>, vector<16x128xf32>,
    return
  }
  func.func @transform_0(%arg0: i32, %arg1: i32) -> (i32, i32) {
    %c0_i32 = arith.constant 0 : i32
    %c0_i32_0 = arith.constant 0 : i32
    return %arg0, %c0_i32 : i32, i32
  }
  func.func @transform_1(%arg0: i32, %arg1: i32) -> (i32, i32) {
    %c0_i32 = arith.constant 0 : i32
    %c0_i32_0 = arith.constant 0 : i32
    return %c0_i32, %arg1 : i32, i32
  }
  func.func @transform_2(%arg0: i32, %arg1: i32) -> (i32, i32) {
    %c0_i32 = arith.constant 0 : i32
    %c0_i32_0 = arith.constant 0 : i32
    return %c0_i32, %arg1 : i32, i32
  }
  func.func @transform_3(%arg0: i32, %arg1: i32) -> (i32, i32) {
    %c0_i32 = arith.constant 0 : i32
    return %arg0, %arg1 : i32, i32
  }
}

</mosaic_0001>

<llo_original>
// kernel: geglu_pallas.1
$region0: #{geglu_pallas.1}
  #allocation0 [shape = 'u32[]', space=smem, size = 0x4, offset = 0x4, fixed_abs, tag = 'smem constant byte address 0x4 - core index']
  #allocation1 [shape = 'u32[144,128]{1,0:T(1,128)}', space=vmem, size = 0x12000, scoped, tag = 'internal scratch']
  %s0 = inlined_call_operand.vmem [shape: f32[16,32], index: 0, kind: input, shape index: {}]
  %s1 = inlined_call_operand.vmem [shape: f32[32,256], index: 1, kind: input, shape index: {}]
  %s2 = inlined_call_operand.vmem [shape: f32[1,256], index: 2, kind: input, shape index: {}]
  %s3 = inlined_call_operand.vmem [shape: f32[16,128], index: 3, kind: output, shape index: {}]
  %s4 = sld [smem:[#allocation0]]
  $region22: #{geglu_pallas.1} parent=0
    _
  %s6 = ssub.s32 1, %s4
  %s7 = scalar_select 0, %s6, %s4
  // Predicated region
  $region2: #{geglu_pallas.1} parent=0 // pred_check
    _
  $region3: #{geglu_pallas.1} parent=0 // pred_check_branch
    %9 = sbr.rel (0) target = $region5
  $region4: #{geglu_pallas.1} parent=0 // pred_region
    _
  $region5: #{geglu_pallas.1} parent=0 // pred_fallthru
    _
  // Predicated region
  $region6: #{geglu_pallas.1} parent=0 // pred_check
    _
  $region7: #{geglu_pallas.1} parent=0 // pred_check_branch
    %11 = sbr.rel (0) target = $region9
  $region8: #{geglu_pallas.1} parent=0 // pred_region
    _
  $region9: #{geglu_pallas.1} parent=0 // pred_fallthru
    _
  // Predicated region
  $region10: #{geglu_pallas.1} parent=0 // pred_check
    _
  $region11: #{geglu_pallas.1} parent=0 // pred_check_branch
    %13 = sbr.rel (0) target = $region13
  $region12: #{geglu_pallas.1} parent=0 // pred_region
    _
  $region13: #{geglu_pallas.1} parent=0 // pred_fallthru
    _
  %v14 = vld [vmem:[%s0] sm:$0xff]
  %v15 = vld [vmem:[%s0 + $0x8] sm:$0xff]
  %v16 = vld [vmem:[%s1] sm:$0xff]
  %v17 = vld [vmem:[%s1 + $0x8] sm:$0xff]
  %v18 = vld [vmem:[%s1 + $0x10] sm:$0xff]
  %v19 = vld [vmem:[%s1 + $0x18] sm:$0xff]
  %v20 = vld [vmem:[%s1 + $0x20] sm:$0xff]
  %v21 = vld [vmem:[%s1 + $0x28] sm:$0xff]
  %v22 = vld [vmem:[%s1 + $0x30] sm:$0xff]
  %v23 = vld [vmem:[%s1 + $0x38] sm:$0xff]
  %v24 = vld [vmem:[%s2] sm:$0x3]
  %v26 = vlaneseq
  %v27 = vshrl.u32 %v26, 7
  %v28 = vsub.s32 0, %v27
  %v29 = vrot.slane %v24, %v28
  %v30 = vlaneseq
  %v31 = vshrl.u32 %v30, 7
  %v32 = vsub.s32 1, %v31
  %v33 = vrot.slane %v24, %v32
  %vm36 = vcmask 261120
  %v38 = vsel %vm36, %v14, 0
  %v41 = vsel %vm36, %v15, 0
  %43 = vmatprep.subr.mxu0 0.0
  %44 = vmatpush1.msra.mxu0 0.0
  %45 = vmatprep.subr.mxu0 0.0
  %46 = vmatpush1.msra.mxu0 0.0
  %47 = vmatprep.subr.mxu0 0.0
  %48 = vmatpush1.msra.mxu0 0.0
  %49 = vmatprep.subr.mxu0 0.0
  %50 = vmatpush1.msra.mxu0 0.0
  %51 = vmatprep.subr.mxu0 0.0
  %52 = vmatpush1.msra.mxu0 0.0
  %53 = vmatprep.subr.mxu0 0.0
  %54 = vmatpush1.msra.mxu0 0.0
  %55 = vmatprep.subr.mxu0 0.0
  %56 = vmatpush1.msra.mxu0 0.0
  %57 = vmatprep.subr.mxu0 0.0
  %58 = vmatpush1.msra.mxu0 0.0
  %59 = vmatprep.subr.mxu0 0.0
  %60 = vmatpush1.msra.mxu0 0.0
  %61 = vmatprep.subr.mxu0 0.0
  %62 = vmatpush1.msra.mxu0 0.0
  %63 = vmatprep.subr.mxu0 0.0
  %64 = vmatpush1.msra.mxu0 0.0
  %65 = vmatprep.subr.mxu0 0.0
  %66 = vmatpush1.msra.mxu0 0.0
  %67 = vmatprep.subr.mxu0 %v23
  %68 = vmatpush1.msra.mxu0 %v22
  %69 = vmatprep.subr.mxu0 %v21
  %70 = vmatpush1.msra.mxu0 %v20
  %71 = vmatprep.subr.mxu0 %v19
  %72 = vmatpush1.msra.mxu0 %v18
  %73 = vmatprep.subr.mxu0 %v17
  %74 = vmatpush1.msra.mxu0 %v16
  %75 = vmatprep.subr.mxu0 0.0
  %76 = vmatpush2.msra.mxu0 0.0
  %77 = vmatprep.subr.mxu0 0.0
  %78 = vmatpush2.msra.mxu0 0.0
  %79 = vmatprep.subr.mxu0 0.0
  %80 = vmatpush2.msra.mxu0 0.0
  %81 = vmatprep.subr.mxu0 0.0
  %82 = vmatpush2.msra.mxu0 0.0
  %83 = vmatprep.subr.mxu0 0.0
  %84 = vmatpush2.msra.mxu0 0.0
  %85 = vmatprep.subr.mxu0 0.0
  %86 = vmatpush2.msra.mxu0 0.0
  %87 = vmatprep.subr.mxu0 0.0
  %88 = vmatpush2.msra.mxu0 0.0
  %89 = vmatprep.subr.mxu0 0.0
  %90 = vmatpush2.msra.mxu0 0.0
  %91 = vmatprep.subr.mxu0 0.0
  %92 = vmatpush2.msra.mxu0 0.0
  %93 = vmatprep.subr.mxu0 0.0
  %94 = vmatpush2.msra.mxu0 0.0
  %95 = vmatprep.subr.mxu0 0.0
  %96 = vmatpush2.msra.mxu0 0.0
  %97 = vmatprep.subr.mxu0 0.0
  %98 = vmatpush2.msra.mxu0 0.0
  %99 = vmatprep.subr.mxu0 0.0
  %100 = vmatpush2.msra.mxu0 0.0
  %101 = vmatprep.subr.mxu0 0.0
  %102 = vmatpush2.msra.mxu0 0.0
  %103 = vmatprep.subr.mxu0 0.0
  %104 = vmatpush2.msra.mxu0 0.0
  %105 = vmatprep.subr.mxu0 0.0
  %106 = vmatpush2.msra.mxu0 0.0
  %107 = vmatprep.mubr.f32.mxu0 0.0
  %108 = vmatmul.mubr.f32.gmra.mxu0 %v38
  %v109 = vpop.f32.mrf.mxu0
  %v110 = vadd.f32 %v29, %v109
  %v111 = vpop.f32.mrf.mxu0
  %v112 = vadd.f32 %v33, %v111
  %113 = vmatprep.mubr.f32.mxu0 0.0
  %114 = vmatmul.mubr.f32.gmra.mxu0 %v41
  %v115 = vpop.f32.mrf.mxu0
  %v116 = vadd.f32 %v29, %v115
  %v117 = vpop.f32.mrf.mxu0
  %v118 = vadd.f32 %v33, %v117
  %119 = vdwg.mxu0
  %v120 = vmul.f32 %v112, 0.5
  %v121 = vmul.f32 %v118, 0.5
  %v122 = vmul.f32 %v112, 0.70710677
  %v123 = vmul.f32 %v118, 0.70710677
  %v124 = verf.f32.pop %v122
  %v125 = verf.f32.pop %v123
  %v126 = vadd.f32 %v124, 1.0
  %v127 = vadd.f32 %v125, 1.0
  %v128 = vmul.f32 %v120, %v126
  %v129 = vmul.f32 %v121, %v127
  %v130 = vmul.f32 %v110, %v128
  %v131 = vmul.f32 %v116, %v129
  %132 = vst [vmem:[%s3] sm:$0xff] %v130
  %133 = vst [vmem:[%s3 + $0x8] sm:$0xff] %v131
  // Predicated region
  $region14: #{geglu_pallas.1} parent=0 // pred_check
    _
  $region15: #{geglu_pallas.1} parent=0 // pred_check_branch
    %135 = sbr.rel (0) target = $region17
  $region16: #{geglu_pallas.1} parent=0 // pred_region
    _
  $region17: #{geglu_pallas.1} parent=0 // pred_fallthru
    _
  // Predicated region
  $region18: #{geglu_pallas.1} parent=0 // pred_check
    _
  $region19: #{geglu_pallas.1} parent=0 // pred_check_branch
    %137 = sbr.rel (0) target = $region21
  $region20: #{geglu_pallas.1} parent=0 // pred_region
    _
  $region21: #{geglu_pallas.1} parent=0 // pred_fallthru
    _

</llo_original>
